<compile_context>
chip_gen: v5e
topology: v5e:2x2
jax: 0.10.0
libtpu: 0.0.40
codegen_flags: <defaults>
</compile_context>

<pallas_src>
import functools

import jax
import jax.numpy as jnp
from jax.experimental import pallas as pl
from jax.experimental.pallas import tpu as pltpu


def _round_up(x, m):
    return ((x + m - 1) // m) * m


# Output-tile width cap: bf16 weight block is at most (2048 x 512) * 2 B = 2 MiB,
# double-buffered 4 MiB -> safe on v5e (16 MiB scoped), v6e (32 MiB) and v7x
# (32 MiB scoped / 64 MiB physical).
MAX_TN = 512


# ----------------------------------------------------------------------------
# Fused matmul kernel (single K block): out = (relu?)(x @ w + b) [* gate]
#   x: (Mp, Kp) bf16   w: (Kp, tn) bf16   b, gate: (1, tn) f32
# Grid = (Np // tn,)  -- no reduction axis, no accumulator scratch.
# ----------------------------------------------------------------------------
def _fused_matmul_kernel(*refs, apply_relu, has_gate):
    if has_gate:
        x_ref, w_ref, b_ref, g_ref, o_ref = refs
    else:
        x_ref, w_ref, b_ref, o_ref = refs
    y = jnp.dot(x_ref[...], w_ref[...], preferred_element_type=jnp.float32)
    y = y + b_ref[...]
    if apply_relu:
        y = jnp.maximum(y, 0.0)
    if has_gate:
        y = y * g_ref[...]
    o_ref[...] = y.astype(o_ref.dtype)


def fused_linear_packed(x, wp, bp, n_out, gate=None, relu=False):
    """y = (relu?)(x @ w + b) [* gate].

    x: (M, K) activations (any float dtype; cast to bf16 here).
    wp: (Kp, Np) bf16 pre-padded weight, bp: (1, Np) f32 pre-padded bias.
    gate: (N,) or None. Returns (M, n_out) f32.
    """
    M, K = x.shape
    Kp, Np = wp.shape
    Mp = _round_up(M, 8)
    tn = min(Np, MAX_TN)

    xp = x.astype(jnp.bfloat16)
    if (Mp, Kp) != (M, K):
        xp = jnp.zeros((Mp, Kp), jnp.bfloat16).at[:M, :K].set(xp)

    has_gate = gate is not None
    in_specs = [
        pl.BlockSpec((Mp, Kp), lambda n: (0, 0)),   # full K in one block
        pl.BlockSpec((Kp, tn), lambda n: (0, n)),
        pl.BlockSpec((1, tn), lambda n: (0, n)),
    ]
    args = [xp, wp, bp]
    if has_gate:
        gp = gate.astype(jnp.float32).reshape(1, -1)
        if gp.shape[1] != Np:
            gp = jnp.zeros((1, Np), jnp.float32).at[:, : gp.shape[1]].set(gp)
        in_specs.append(pl.BlockSpec((1, tn), lambda n: (0, n)))
        args.append(gp)

    out = pl.pallas_call(
        functools.partial(
            _fused_matmul_kernel, apply_relu=relu, has_gate=has_gate
        ),
        out_shape=jax.ShapeDtypeStruct((Mp, Np), jnp.float32),
        grid_spec=pltpu.PrefetchScalarGridSpec(
            num_scalar_prefetch=0,
            grid=(Np // tn,),
            in_specs=in_specs,
            out_specs=pl.BlockSpec((Mp, tn), lambda n: (0, n)),
        ),
        compiler_params=pltpu.CompilerParams(
            dimension_semantics=("parallel",)
        ),
    )(*args)
    return out[:M, :n_out]


# ----------------------------------------------------------------------------
# Conv (valid, stride 1) as im2col + fused Pallas matmul (ReLU + HAT gate).
# Gate is applied per output channel BEFORE maxpool; legal because the
# sigmoid gate is strictly positive, so it commutes with the max.
# ----------------------------------------------------------------------------
def conv_relu_gate(x_nhwc, conv_pack, gate):
    wp, bp = conv_pack["wp"], conv_pack["bp"]
    kh, kw, cout = conv_pack["kh"], conv_pack["kw"], conv_pack["cout"]
    B, H, W, C = x_nhwc.shape
    oh, ow = H - kh + 1, W - kw + 1
    patches = [
        x_nhwc[:, i : i + oh, j : j + ow, :] for i in range(kh) for j in range(kw)
    ]
    p = jnp.stack(patches, axis=3).reshape(B * oh * ow, kh * kw * C)
    out = fused_linear_packed(p, wp, bp, cout, gate=gate, relu=True)
    return out.reshape(B, oh, ow, cout)


def maxpool2(h_nhwc):
    B, H, W, C = h_nhwc.shape
    Hh, Wh = H // 2, W // 2
    h = h_nhwc[:, : Hh * 2, : Wh * 2, :].reshape(B, Hh, 2, Wh, 2, C)
    return h.max(axis=(2, 4))


# ----------------------------------------------------------------------------
# One-time parameter packing (hoisted out of the forward pass):
# conv weights reshaped to (kh*kw*cin, cout), fc weights transposed, all
# weights padded + cast to bf16, biases padded to (1, Np) f32.
# ----------------------------------------------------------------------------
def _pack_matrix(w_mat, b):
    K, N = w_mat.shape
    Kp = _round_up(K, 8)
    Np = _round_up(N, 128)
    wp = jnp.zeros((Kp, Np), jnp.bfloat16).at[:K, :N].set(
        w_mat.astype(jnp.bfloat16)
    )
    bp = jnp.zeros((1, Np), jnp.float32).at[0, :N].set(b.astype(jnp.float32))
    return wp, bp


def prepare_params(params):
    packed = {}
    for name in ("c1", "c2", "c3"):
        w = params[f"{name}_w"]
        cout, cin, kh, kw = w.shape
        # column order (kh, kw, cin) matches the im2col patch layout
        w_mat = jnp.transpose(w, (2, 3, 1, 0)).reshape(kh * kw * cin, cout)
        wp, bp = _pack_matrix(w_mat, params[f"{name}_b"])
        packed[name] = {"wp": wp, "bp": bp, "kh": kh, "kw": kw, "cout": cout}
    for name in ("fc1", "fc2", "last"):
        wp, bp = _pack_matrix(params[f"{name}_w"].T, params[f"{name}_b"])
        packed[name] = {"wp": wp, "bp": bp, "n_out": params[f"{name}_w"].shape[0]}
    for name in ("ec1", "ec2", "ec3", "efc1", "efc2"):
        packed[name] = params[name]
    return packed


# ----------------------------------------------------------------------------
# Full Net forward ('dil' scenario, no mixup branch).
# ----------------------------------------------------------------------------
def net_forward(packed, t, x_nchw, s=1.0):
    # HAT gate masks: sigmoid(s * embedding(t)), kept as (1, dim) like PyTorch
    gc1 = jax.nn.sigmoid(s * packed["ec1"][t : t + 1])
    gc2 = jax.nn.sigmoid(s * packed["ec2"][t : t + 1])
    gc3 = jax.nn.sigmoid(s * packed["ec3"][t : t + 1])
    gfc1 = jax.nn.sigmoid(s * packed["efc1"][t : t + 1])
    gfc2 = jax.nn.sigmoid(s * packed["efc2"][t : t + 1])

    x = jnp.transpose(x_nchw, (0, 2, 3, 1))  # NCHW -> NHWC

    # block 1: conv -> relu -> gate (drop1 = identity) -> maxpool
    h = conv_relu_gate(x, packed["c1"], gc1[0])
    h = maxpool2(h)
    # block 2
    h = conv_relu_gate(h, packed["c2"], gc2[0])
    h = maxpool2(h)
    # block 3
    h = conv_relu_gate(h, packed["c3"], gc3[0])
    h = maxpool2(h)

    # flatten in PyTorch NCHW order
    B = x_nchw.shape[0]
    h = jnp.transpose(h, (0, 3, 1, 2)).reshape(B, -1)

    # fc1, fc2 with fused ReLU + gate (drop2 = identity)
    h = fused_linear_packed(
        h, packed["fc1"]["wp"], packed["fc1"]["bp"], packed["fc1"]["n_out"],
        gate=gfc1[0], relu=True,
    )
    h = fused_linear_packed(
        h, packed["fc2"]["wp"], packed["fc2"]["bp"], packed["fc2"]["n_out"],
        gate=gfc2[0], relu=True,
    )

    # F.normalize(h, dim=1)
    norm = jnp.linalg.norm(h, axis=1, keepdims=True)
    normalized = h / jnp.maximum(norm, 1e-12)

    # last head ('dil' scenario) -- no gate, no relu, single-step grid
    y = fused_linear_packed(
        h, packed["last"]["wp"], packed["last"]["bp"], packed["last"]["n_out"]
    )

    return {
        "masks": [gc1, gc2, gc3, gfc1, gfc2],
        "normalized_pooled_rep": normalized,
        "y": y,
    }


# ----------------------------------------------------------------------------
# Deterministic parameter construction (synthetic, matches module shapes).
# ----------------------------------------------------------------------------
def make_params(key, ncha, size, ntasks, nclasses):
    k1 = size // 8
    k2 = size // 10
    s1 = (size - k1 + 1) // 2
    s2 = (s1 - k2 + 1) // 2
    smid = (s2 - 2 + 1) // 2

    keys = jax.random.split(key, 20)
    i = iter(range(20))

    def nrm(k, shape, scale=0.05):
        return scale * jax.random.normal(k, shape, dtype=jnp.float32)

    params = {
        "c1_w": nrm(keys[next(i)], (64, ncha, k1, k1)),
        "c1_b": nrm(keys[next(i)], (64,)),
        "c2_w": nrm(keys[next(i)], (128, 64, k2, k2)),
        "c2_b": nrm(keys[next(i)], (128,)),
        "c3_w": nrm(keys[next(i)], (256, 128, 2, 2)),
        "c3_b": nrm(keys[next(i)], (256,)),
        "fc1_w": nrm(keys[next(i)], (2048, 256 * smid * smid)),
        "fc1_b": nrm(keys[next(i)], (2048,)),
        "fc2_w": nrm(keys[next(i)], (2048, 2048)),
        "fc2_b": nrm(keys[next(i)], (2048,)),
        "last_w": nrm(keys[next(i)], (nclasses, 2048)),
        "last_b": nrm(keys[next(i)], (nclasses,)),
        "ec1": nrm(keys[next(i)], (ntasks, 64), 1.0),
        "ec2": nrm(keys[next(i)], (ntasks, 128), 1.0),
        "ec3": nrm(keys[next(i)], (ntasks, 256), 1.0),
        "efc1": nrm(keys[next(i)], (ntasks, 2048), 1.0),
        "efc2": nrm(keys[next(i)], (ntasks, 2048), 1.0),
    }
    return params, smid


if __name__ == "__main__":
    # small synthetic config: args.image_channel=4, args.image_size=16,
    # ntasks=3, scenario='dil' with nclasses=10, batch=2
    B, ncha, size = 2, 4, 16
    ntasks, nclasses = 3, 10

    key = jax.random.PRNGKey(0)
    pkey, xkey = jax.random.split(key)
    params, smid = make_params(pkey, ncha, size, ntasks, nclasses)
    packed = prepare_params(params)  # one-time weight packing (bf16 + pad)

    x = jax.random.normal(xkey, (B, ncha, size, size), dtype=jnp.float32)

    out = net_forward(packed, t=1, x_nchw=x, s=1.0)
    jax.block_until_ready(out["y"])
    jax.block_until_ready(out["normalized_pooled_rep"])

    assert out["y"].shape == (B, nclasses)
    assert out["normalized_pooled_rep"].shape == (B, 2048)
    assert out["masks"][0].shape == (1, 64) and out["masks"][4].shape == (1, 2048)
    print("KERNEL_OK")
</pallas_src>

<mosaic_0001>
module attributes {stable_mosaic.version = 11 : i64} {
  func.func @_fused_matmul_kernel(%arg0: i32, %arg1: memref<456x16xbf16, #tpu.memory_space<vmem>>, %arg2: memref<16x128xbf16, #tpu.memory_space<vmem>>, %arg3: memref<1x128xf32, #tpu.memory_space<vmem>>, %arg4: memref<1x128xf32, #tpu.memory_space<vmem>>, %arg5: memref<456x128xf32, #tpu.memory_space<vmem>>) attributes {dimension_semantics = [#tpu.dimension_semantics<parallel>], iteration_bounds = array<i64: 1>, scalar_prefetch = 0 : i64, scratch_operands = 0 : i64, tpu.core_type = #tpu.core_type<tc>, window_params = [{pipeline_mode = #tpu.pipeline_mode<synchronous>, transform_indices = @transform_0, window_bounds = array<i64: 456, 16>}, {transform_indices = @transform_1, window_bounds = array<i64: 16, 128>}, {transform_indices = @transform_2, window_bounds = array<i64: 1, 128>}, {transform_indices = @transform_3, window_bounds = array<i64: 1, 128>}, {transform_indices = @transform_4, window_bounds = array<i64: 456, 128>}]} {
    %c0 = arith.constant 0 : index
    %c0_0 = arith.constant 0 : index
    %0 = vector.load %arg1[%c0, %c0_0] : memref<456x16xbf16, #tpu.memory_space<vmem>>, vector<456x16xbf16>
    %c0_1 = arith.constant 0 : index
    %c0_2 = arith.constant 0 : index
    %1 = vector.load %arg2[%c0_1, %c0_2] : memref<16x128xbf16, #tpu.memory_space<vmem>>, vector<16x128xbf16>
    %cst = arith.constant dense<0.000000e+00> : vector<456x128xf32>
    %2 = tpu.matmul %0, %1, %cst {dimension_numbers = #tpu.dot_dimension_numbers<[1], [0], [0], [1], [0, 0, 1, 1], [], []>} : vector<456x16xbf16>, vector<16x128xbf16>, vector<456x128xf32> -> vector<456x128xf32>
    %c0_3 = arith.constant 0 : index
    %c0_4 = arith.constant 0 : index
    %3 = vector.load %arg3[%c0_3, %c0_4] : memref<1x128xf32, #tpu.memory_space<vmem>>, vector<1x128xf32>
    %4 = vector.broadcast %3 : vector<1x128xf32> to vector<456x128xf32>
    %5 = arith.addf %2, %4 : vector<456x128xf32>
    %cst_5 = arith.constant 0.000000e+00 : f32
    %6 = vector.broadcast %cst_5 : f32 to vector<456x128xf32>
    %7 = arith.maximumf %5, %6 : vector<456x128xf32>
    %c0_6 = arith.constant 0 : index
    %c0_7 = arith.constant 0 : index
    %8 = vector.load %arg4[%c0_6, %c0_7] : memref<1x128xf32, #tpu.memory_space<vmem>>, vector<1x128xf32>
    %9 = vector.broadcast %8 : vector<1x128xf32> to vector<456x128xf32>
    %10 = arith.mulf %7, %9 : vector<456x128xf32>
    %c0_8 = arith.constant 0 : index
    %c0_9 = arith.constant 0 : index
    %11 = vector.load %arg5[%c0_8, %c0_9] : memref<456x128xf32, #tpu.memory_space<vmem>>, vector<456x128xf32>
    tpu.vector_store %arg5[%c0_8, %c0_9], %10 {strides = array<i32>} : memref<456x128xf32, #tpu.memory_space<vmem>>, vector<456x128xf32>,
    return
  }
  func.func @transform_0(%arg0: i32) -> (i32, i32) {
    %c0_i32 = arith.constant 0 : i32
    %c0_i32_0 = arith.constant 0 : i32
    %c0_i32_1 = arith.constant 0 : i32
    return %c0_i32, %c0_i32_0 : i32, i32
  }
  func.func @transform_1(%arg0: i32) -> (i32, i32) {
    %c0_i32 = arith.constant 0 : i32
    %c0_i32_0 = arith.constant 0 : i32
    return %c0_i32, %arg0 : i32, i32
  }
  func.func @transform_2(%arg0: i32) -> (i32, i32) {
    %c0_i32 = arith.constant 0 : i32
    %c0_i32_0 = arith.constant 0 : i32
    return %c0_i32, %arg0 : i32, i32
  }
  func.func @transform_3(%arg0: i32) -> (i32, i32) {
    %c0_i32 = arith.constant 0 : i32
    %c0_i32_0 = arith.constant 0 : i32
    return %c0_i32, %arg0 : i32, i32
  }
  func.func @transform_4(%arg0: i32) -> (i32, i32) {
    %c0_i32 = arith.constant 0 : i32
    %c0_i32_0 = arith.constant 0 : i32
    return %c0_i32, %arg0 : i32, i32
  }
}

</mosaic_0001>

<llo_original>
// kernel: tpu_custom_call.1
$region0: #{tpu_custom_call.1}
  #allocation0 [shape = 'u32[]', space=smem, size = 0x4, offset = 0x4, fixed_abs, tag = 'smem constant byte address 0x4 - core index']
  #allocation1 [shape = 'u32[72,128]{1,0:T(1,128)}', space=vmem, size = 0x9000, scoped, tag = 'internal scratch']
  %s0 = inlined_call_operand.vmem [shape: bf16[456,16], index: 0, kind: input, shape index: {}]
  %s1 = inlined_call_operand.vmem [shape: bf16[16,128], index: 1, kind: input, shape index: {}]
  %s2 = inlined_call_operand.vmem [shape: f32[1,128], index: 2, kind: input, shape index: {}]
  %s3 = inlined_call_operand.vmem [shape: f32[1,128], index: 3, kind: input, shape index: {}]
  %s4 = inlined_call_operand.hbm [shape: f32[456,128], index: 4, kind: output, shape index: {}]
  %s5 = sld [smem:[#allocation0]]
  $region26: #{tpu_custom_call.1} parent=0
    _
  %s7 = ssub.s32 1, %s5
  %s8 = scalar_select 0, %s7, %s5
  $region1: #{tpu_custom_call.1} parent=0
    #allocation2 [shape = 'u8[233472]{0}', space=vmem, size = 0x39000, scoped, tag = 'output window, operand 0, single buffered']
    #allocation3 [shape = 's32[1]{0}', space=sflag, size = 0x4, scoped, tag = 'scoped memory for tpu_custom_call.1']
    %9 = vsyncpa [#allocation3], 0
    // Predicated region
    $region2: #{tpu_custom_call.1} parent=1 // pred_check
      _
    $region3: #{tpu_custom_call.1} parent=1 // pred_check_branch
      %11 = sbr.rel (0) target = $region5
    $region4: #{tpu_custom_call.1} parent=1 // pred_region
      _
    $region5: #{tpu_custom_call.1} parent=1 // pred_fallthru
      _
    // Predicated region
    $region6: #{tpu_custom_call.1} parent=1 // pred_check
      _
    $region7: #{tpu_custom_call.1} parent=1 // pred_check_branch
      %13 = sbr.rel (0) target = $region9
    $region8: #{tpu_custom_call.1} parent=1 // pred_region
      _
    $region9: #{tpu_custom_call.1} parent=1 // pred_fallthru
      _
    // Predicated region
    $region10: #{tpu_custom_call.1} parent=1 // pred_check
      _
    $region11: #{tpu_custom_call.1} parent=1 // pred_check_branch
      %15 = sbr.rel (0) target = $region13
    $region12: #{tpu_custom_call.1} parent=1 // pred_region
      _
    $region13: #{tpu_custom_call.1} parent=1 // pred_fallthru
      _
    // Predicated region
    $region14: #{tpu_custom_call.1} parent=1 // pred_check
      _
    $region15: #{tpu_custom_call.1} parent=1 // pred_check_branch
      %17 = sbr.rel (0) target = $region17
    $region16: #{tpu_custom_call.1} parent=1 // pred_region
      _
    $region17: #{tpu_custom_call.1} parent=1 // pred_fallthru
      _
    %v19 = vld [vmem:[%s0] sm:$0xf]
    %v20 = vld [vmem:[%s0 + $0x4] sm:$0xf]
    %v21 = vld [vmem:[%s0 + $0x8] sm:$0xf]
    %v22 = vld [vmem:[%s0 + $0xc] sm:$0xf]
    %v23 = vld [vmem:[%s0 + $0x10] sm:$0xf]
    %v24 = vld [vmem:[%s0 + $0x14] sm:$0xf]
    %v25 = vld [vmem:[%s0 + $0x18] sm:$0xf]
    %v26 = vld [vmem:[%s0 + $0x1c] sm:$0xf]
    %v27 = vld [vmem:[%s0 + $0x20] sm:$0xf]
    %v28 = vld [vmem:[%s0 + $0x24] sm:$0xf]
    %v29 = vld [vmem:[%s0 + $0x28] sm:$0xf]
    %v30 = vld [vmem:[%s0 + $0x2c] sm:$0xf]
    %v31 = vld [vmem:[%s0 + $0x30] sm:$0xf]
    %v32 = vld [vmem:[%s0 + $0x34] sm:$0xf]
    %v33 = vld [vmem:[%s0 + $0x38] sm:$0xf]
    %v34 = vld [vmem:[%s0 + $0x3c] sm:$0xf]
    %v35 = vld [vmem:[%s0 + $0x40] sm:$0xf]
    %v36 = vld [vmem:[%s0 + $0x44] sm:$0xf]
    %v37 = vld [vmem:[%s0 + $0x48] sm:$0xf]
    %v38 = vld [vmem:[%s0 + $0x4c] sm:$0xf]
    %v39 = vld [vmem:[%s0 + $0x50] sm:$0xf]
    %v40 = vld [vmem:[%s0 + $0x54] sm:$0xf]
    %v41 = vld [vmem:[%s0 + $0x58] sm:$0xf]
    %v42 = vld [vmem:[%s0 + $0x5c] sm:$0xf]
    %v43 = vld [vmem:[%s0 + $0x60] sm:$0xf]
    %v44 = vld [vmem:[%s0 + $0x64] sm:$0xf]
    %v45 = vld [vmem:[%s0 + $0x68] sm:$0xf]
    %v46 = vld [vmem:[%s0 + $0x6c] sm:$0xf]
    %v47 = vld [vmem:[%s0 + $0x70] sm:$0xf]
    %v48 = vld [vmem:[%s0 + $0x74] sm:$0xf]
    %v49 = vld [vmem:[%s0 + $0x78] sm:$0xf]
    %v50 = vld [vmem:[%s0 + $0x7c] sm:$0xf]
    %v51 = vld [vmem:[%s0 + $0x80] sm:$0xf]
    %v52 = vld [vmem:[%s0 + $0x84] sm:$0xf]
    %v53 = vld [vmem:[%s0 + $0x88] sm:$0xf]
    %v54 = vld [vmem:[%s0 + $0x8c] sm:$0xf]
    %v55 = vld [vmem:[%s0 + $0x90] sm:$0xf]
    %v56 = vld [vmem:[%s0 + $0x94] sm:$0xf]
    %v57 = vld [vmem:[%s0 + $0x98] sm:$0xf]
    %v58 = vld [vmem:[%s0 + $0x9c] sm:$0xf]
    %v59 = vld [vmem:[%s0 + $0xa0] sm:$0xf]
    %v60 = vld [vmem:[%s0 + $0xa4] sm:$0xf]
    %v61 = vld [vmem:[%s0 + $0xa8] sm:$0xf]
    %v62 = vld [vmem:[%s0 + $0xac] sm:$0xf]
    %v63 = vld [vmem:[%s0 + $0xb0] sm:$0xf]
    %v64 = vld [vmem:[%s0 + $0xb4] sm:$0xf]
    %v65 = vld [vmem:[%s0 + $0xb8] sm:$0xf]
    %v66 = vld [vmem:[%s0 + $0xbc] sm:$0xf]
    %v67 = vld [vmem:[%s0 + $0xc0] sm:$0xf]
    %v68 = vld [vmem:[%s0 + $0xc4] sm:$0xf]
    %v69 = vld [vmem:[%s0 + $0xc8] sm:$0xf]
    %v70 = vld [vmem:[%s0 + $0xcc] sm:$0xf]
    %v71 = vld [vmem:[%s0 + $0xd0] sm:$0xf]
    %v72 = vld [vmem:[%s0 + $0xd4] sm:$0xf]
    %v73 = vld [vmem:[%s0 + $0xd8] sm:$0xf]
    %v74 = vld [vmem:[%s0 + $0xdc] sm:$0xf]
    %v75 = vld [vmem:[%s0 + $0xe0] sm:$0xf]
    %v76 = vld [vmem:[%s1] sm:$0xf]
    %v77 = vld [vmem:[%s1 + $0x4] sm:$0xf]
    %v78 = vld [vmem:[%s2] sm:$0x1]
    %v80 = vperm.slane %v78, 0
    %v139 = vunpack.c.l.b16 %v19
    %v140 = vunpack.c.l.b16 %v20
    %v141 = vunpack.c.l.b16 %v21
    %v142 = vunpack.c.l.b16 %v22
    %v143 = vunpack.c.l.b16 %v23
    %v144 = vunpack.c.l.b16 %v24
    %v145 = vunpack.c.l.b16 %v25
    %v146 = vunpack.c.l.b16 %v26
    %v147 = vunpack.c.l.b16 %v27
    %v148 = vunpack.c.l.b16 %v28
    %v149 = vunpack.c.l.b16 %v29
    %v150 = vunpack.c.l.b16 %v30
    %v151 = vunpack.c.l.b16 %v31
    %v152 = vunpack.c.l.b16 %v32
    %v153 = vunpack.c.l.b16 %v33
    %v154 = vunpack.c.l.b16 %v34
    %v155 = vunpack.c.l.b16 %v35
    %v156 = vunpack.c.l.b16 %v36
    %v157 = vunpack.c.l.b16 %v37
    %v158 = vunpack.c.l.b16 %v38
    %v159 = vunpack.c.l.b16 %v39
    %v160 = vunpack.c.l.b16 %v40
    %v161 = vunpack.c.l.b16 %v41
    %v162 = vunpack.c.l.b16 %v42
    %v163 = vunpack.c.l.b16 %v43
    %v164 = vunpack.c.l.b16 %v44
    %v165 = vunpack.c.l.b16 %v45
    %v166 = vunpack.c.l.b16 %v46
    %v167 = vunpack.c.l.b16 %v47
    %v168 = vunpack.c.l.b16 %v48
    %v169 = vunpack.c.l.b16 %v49
    %v170 = vunpack.c.l.b16 %v50
    %v171 = vunpack.c.l.b16 %v51
    %v172 = vunpack.c.l.b16 %v52
    %v173 = vunpack.c.l.b16 %v53
    %v174 = vunpack.c.l.b16 %v54
    %v175 = vunpack.c.l.b16 %v55
    %v176 = vunpack.c.l.b16 %v56
    %v177 = vunpack.c.l.b16 %v57
    %v178 = vunpack.c.l.b16 %v58
    %v179 = vunpack.c.l.b16 %v59
    %v180 = vunpack.c.l.b16 %v60
    %v181 = vunpack.c.l.b16 %v61
    %v182 = vunpack.c.l.b16 %v62
    %v183 = vunpack.c.l.b16 %v63
    %v184 = vunpack.c.l.b16 %v64
    %v185 = vunpack.c.l.b16 %v65
    %v186 = vunpack.c.l.b16 %v66
    %v187 = vunpack.c.l.b16 %v67
    %v188 = vunpack.c.l.b16 %v68
    %v189 = vunpack.c.l.b16 %v69
    %v190 = vunpack.c.l.b16 %v70
    %v191 = vunpack.c.l.b16 %v71
    %v192 = vunpack.c.l.b16 %v72
    %v193 = vunpack.c.l.b16 %v73
    %v194 = vunpack.c.l.b16 %v74
    %v195 = vunpack.c.l.b16 %v75
    %v196 = vpack.c.b16 %v140, %v139
    %v197 = vpack.c.b16 %v142, %v141
    %v198 = vpack.c.b16 %v144, %v143
    %v199 = vpack.c.b16 %v146, %v145
    %v200 = vpack.c.b16 %v148, %v147
    %v201 = vpack.c.b16 %v150, %v149
    %v202 = vpack.c.b16 %v152, %v151
    %v203 = vpack.c.b16 %v154, %v153
    %v204 = vpack.c.b16 %v156, %v155
    %v205 = vpack.c.b16 %v158, %v157
    %v206 = vpack.c.b16 %v160, %v159
    %v207 = vpack.c.b16 %v162, %v161
    %v208 = vpack.c.b16 %v164, %v163
    %v209 = vpack.c.b16 %v166, %v165
    %v210 = vpack.c.b16 %v168, %v167
    %v211 = vpack.c.b16 %v170, %v169
    %v212 = vpack.c.b16 %v172, %v171
    %v213 = vpack.c.b16 %v174, %v173
    %v214 = vpack.c.b16 %v176, %v175
    %v215 = vpack.c.b16 %v178, %v177
    %v216 = vpack.c.b16 %v180, %v179
    %v217 = vpack.c.b16 %v182, %v181
    %v218 = vpack.c.b16 %v184, %v183
    %v219 = vpack.c.b16 %v186, %v185
    %v220 = vpack.c.b16 %v188, %v187
    %v221 = vpack.c.b16 %v190, %v189
    %v222 = vpack.c.b16 %v192, %v191
    %v223 = vpack.c.b16 %v194, %v193
    %v224 = vpack.c.b16 %v195, %v195
    %v227 = vunpack.c.l.b16 %v76
    %v228 = vunpack.c.l.b16 %v77
    %v229 = vpack.c.b16 %v228, %v227
    %vm231 = vcmask 130048
    %v233 = vsel %vm231, %v196, 0
    %v236 = vsel %vm231, %v197, 0
    %v239 = vsel %vm231, %v198, 0
    %v242 = vsel %vm231, %v199, 0
    %v245 = vsel %vm231, %v200, 0
    %v248 = vsel %vm231, %v201, 0
    %v251 = vsel %vm231, %v202, 0
    %v254 = vsel %vm231, %v203, 0
    %v257 = vsel %vm231, %v204, 0
    %v260 = vsel %vm231, %v205, 0
    %v263 = vsel %vm231, %v206, 0
    %v266 = vsel %vm231, %v207, 0
    %v269 = vsel %vm231, %v208, 0
    %v272 = vsel %vm231, %v209, 0
    %v275 = vsel %vm231, %v210, 0
    %v278 = vsel %vm231, %v211, 0
    %v281 = vsel %vm231, %v212, 0
    %v284 = vsel %vm231, %v213, 0
    %v287 = vsel %vm231, %v214, 0
    %v290 = vsel %vm231, %v215, 0
    %v293 = vsel %vm231, %v216, 0
    %v296 = vsel %vm231, %v217, 0
    %v299 = vsel %vm231, %v218, 0
    %v302 = vsel %vm231, %v219, 0
    %v305 = vsel %vm231, %v220, 0
    %v308 = vsel %vm231, %v221, 0
    %v311 = vsel %vm231, %v222, 0
    %v314 = vsel %vm231, %v223, 0
    %v317 = vsel %vm231, %v224, 0
    %319 = vmatpush.bf16.msra.mxu0 0
    %320 = vmatpush.bf16.msra.mxu0 0
    %321 = vmatpush.bf16.msra.mxu0 0
    %322 = vmatpush.bf16.msra.mxu0 0
    %323 = vmatpush.bf16.msra.mxu0 0
    %324 = vmatpush.bf16.msra.mxu0 0
    %325 = vmatpush.bf16.msra.mxu0 0
    %326 = vmatpush.bf16.msra.mxu0 %v229
    %327 = vmatmul.bf16.gmra.mxu0 %v233
    %v328 = vpop.f32.mrf.mxu0
    %v329 = vadd.f32 %v80, %v328
    %v330 = vpop.f32.mrf.mxu0
    %v331 = vadd.f32 %v80, %v330
    %332 = vmatmul.bf16.gmra.mxu0 %v236
    %v333 = vpop.f32.mrf.mxu0
    %v334 = vadd.f32 %v80, %v333
    %v335 = vpop.f32.mrf.mxu0
    %v336 = vadd.f32 %v80, %v335
    %337 = vmatmul.bf16.gmra.mxu0 %v239
    %v338 = vpop.f32.mrf.mxu0
    %v339 = vadd.f32 %v80, %v338
    %v340 = vpop.f32.mrf.mxu0
    %v341 = vadd.f32 %v80, %v340
    %342 = vmatmul.bf16.gmra.mxu0 %v242
    %v343 = vpop.f32.mrf.mxu0
    %v344 = vadd.f32 %v80, %v343
    %v345 = vpop.f32.mrf.mxu0
    %v346 = vadd.f32 %v80, %v345
    %347 = vmatmul.bf16.gmra.mxu0 %v245
    %v348 = vpop.f32.mrf.mxu0
    %v349 = vadd.f32 %v80, %v348
    %v350 = vpop.f32.mrf.mxu0
    %v351 = vadd.f32 %v80, %v350
    %352 = vmatmul.bf16.gmra.mxu0 %v248
    %v353 = vpop.f32.mrf.mxu0
    %v354 = vadd.f32 %v80, %v353
    %v355 = vpop.f32.mrf.mxu0
    %v356 = vadd.f32 %v80, %v355
    %357 = vmatmul.bf16.gmra.mxu0 %v251
    %v358 = vpop.f32.mrf.mxu0
    %v359 = vadd.f32 %v80, %v358
    %v360 = vpop.f32.mrf.mxu0
    %v361 = vadd.f32 %v80, %v360
    %362 = vmatmul.bf16.gmra.mxu0 %v254
    %v363 = vpop.f32.mrf.mxu0
    %v364 = vadd.f32 %v80, %v363
    %v365 = vpop.f32.mrf.mxu0
    %v366 = vadd.f32 %v80, %v365
    %367 = vmatmul.bf16.gmra.mxu0 %v257
    %v368 = vpop.f32.mrf.mxu0
    %v369 = vadd.f32 %v80, %v368
    %v370 = vpop.f32.mrf.mxu0
    %v371 = vadd.f32 %v80, %v370
    %372 = vmatmul.bf16.gmra.mxu0 %v260
    %v373 = vpop.f32.mrf.mxu0
    %v374 = vadd.f32 %v80, %v373
    %v375 = vpop.f32.mrf.mxu0
    %v376 = vadd.f32 %v80, %v375
    %377 = vmatmul.bf16.gmra.mxu0 %v263
    %v378 = vpop.f32.mrf.mxu0
    %v379 = vadd.f32 %v80, %v378
    %v380 = vpop.f32.mrf.mxu0
    %v381 = vadd.f32 %v80, %v380
    %382 = vmatmul.bf16.gmra.mxu0 %v266
    %v383 = vpop.f32.mrf.mxu0
    %v384 = vadd.f32 %v80, %v383
    %v385 = vpop.f32.mrf.mxu0
    %v386 = vadd.f32 %v80, %v385
    %387 = vmatmul.bf16.gmra.mxu0 %v269
    %v388 = vpop.f32.mrf.mxu0
    %v389 = vadd.f32 %v80, %v388
    %v390 = vpop.f32.mrf.mxu0
    %v391 = vadd.f32 %v80, %v390
    %392 = vmatmul.bf16.gmra.mxu0 %v272
    %v393 = vpop.f32.mrf.mxu0
    %v394 = vadd.f32 %v80, %v393
    %v395 = vpop.f32.mrf.mxu0
    %v396 = vadd.f32 %v80, %v395
    %397 = vmatmul.bf16.gmra.mxu0 %v275
    %v398 = vpop.f32.mrf.mxu0
    %v399 = vadd.f32 %v80, %v398
    %v400 = vpop.f32.mrf.mxu0
    %v401 = vadd.f32 %v80, %v400
    %402 = vmatmul.bf16.gmra.mxu0 %v278
    %v403 = vpop.f32.mrf.mxu0
    %v404 = vadd.f32 %v80, %v403
    %v405 = vpop.f32.mrf.mxu0
    %v406 = vadd.f32 %v80, %v405
    %407 = vmatmul.bf16.gmra.mxu0 %v281
    %v408 = vpop.f32.mrf.mxu0
    %v409 = vadd.f32 %v80, %v408
    %v410 = vpop.f32.mrf.mxu0
    %v411 = vadd.f32 %v80, %v410
    %412 = vmatmul.bf16.gmra.mxu0 %v284
    %v413 = vpop.f32.mrf.mxu0
    %v414 = vadd.f32 %v80, %v413
    %v415 = vpop.f32.mrf.mxu0
    %v416 = vadd.f32 %v80, %v415
    %417 = vmatmul.bf16.gmra.mxu0 %v287
    %v418 = vpop.f32.mrf.mxu0
    %v419 = vadd.f32 %v80, %v418
    %v420 = vpop.f32.mrf.mxu0
    %v421 = vadd.f32 %v80, %v420
    %422 = vmatmul.bf16.gmra.mxu0 %v290
    %v423 = vpop.f32.mrf.mxu0
    %v424 = vadd.f32 %v80, %v423
    %v425 = vpop.f32.mrf.mxu0
    %v426 = vadd.f32 %v80, %v425
    %427 = vmatmul.bf16.gmra.mxu0 %v293
    %v428 = vpop.f32.mrf.mxu0
    %v429 = vadd.f32 %v80, %v428
    %v430 = vpop.f32.mrf.mxu0
    %v431 = vadd.f32 %v80, %v430
    %432 = vmatmul.bf16.gmra.mxu0 %v296
    %v433 = vpop.f32.mrf.mxu0
    %v434 = vadd.f32 %v80, %v433
    %v435 = vpop.f32.mrf.mxu0
    %v436 = vadd.f32 %v80, %v435
    %437 = vmatmul.bf16.gmra.mxu0 %v299
    %v438 = vpop.f32.mrf.mxu0
    %v439 = vadd.f32 %v80, %v438
    %v440 = vpop.f32.mrf.mxu0
    %v441 = vadd.f32 %v80, %v440
    %442 = vmatmul.bf16.gmra.mxu0 %v302
    %v443 = vpop.f32.mrf.mxu0
    %v444 = vadd.f32 %v80, %v443
    %v445 = vpop.f32.mrf.mxu0
    %v446 = vadd.f32 %v80, %v445
    %447 = vmatmul.bf16.gmra.mxu0 %v305
    %v448 = vpop.f32.mrf.mxu0
    %v449 = vadd.f32 %v80, %v448
    %v450 = vpop.f32.mrf.mxu0
    %v451 = vadd.f32 %v80, %v450
    %452 = vmatmul.bf16.gmra.mxu0 %v308
    %v453 = vpop.f32.mrf.mxu0
    %v454 = vadd.f32 %v80, %v453
    %v455 = vpop.f32.mrf.mxu0
    %v456 = vadd.f32 %v80, %v455
    %457 = vmatmul.bf16.gmra.mxu0 %v311
    %v458 = vpop.f32.mrf.mxu0
    %v459 = vadd.f32 %v80, %v458
    %v460 = vpop.f32.mrf.mxu0
    %v461 = vadd.f32 %v80, %v460
    %462 = vmatmul.bf16.gmra.mxu0 %v314
    %v463 = vpop.f32.mrf.mxu0
    %v464 = vadd.f32 %v80, %v463
    %v465 = vpop.f32.mrf.mxu0
    %v466 = vadd.f32 %v80, %v465
    %467 = vmatmul.bf16.gmra.mxu0 %v317
    %v468 = vpop.f32.mrf.mxu0
    %v469 = vadd.f32 %v80, %v468
    %v470 = vpop.f32.mrf.mxu0
    %471 = vdwg.mxu0
    %v472 = vmax.f32 %v329, 0.0
    %v473 = vmax.f32 %v331, 0.0
    %v474 = vmax.f32 %v334, 0.0
    %v475 = vmax.f32 %v336, 0.0
    %v476 = vmax.f32 %v339, 0.0
    %v477 = vmax.f32 %v341, 0.0
    %v478 = vmax.f32 %v344, 0.0
    %v479 = vmax.f32 %v346, 0.0
    %v480 = vmax.f32 %v349, 0.0
    %v481 = vmax.f32 %v351, 0.0
    %v482 = vmax.f32 %v354, 0.0
    %v483 = vmax.f32 %v356, 0.0
    %v484 = vmax.f32 %v359, 0.0
    %v485 = vmax.f32 %v361, 0.0
    %v486 = vmax.f32 %v364, 0.0
    %v487 = vmax.f32 %v366, 0.0
    %v488 = vmax.f32 %v369, 0.0
    %v489 = vmax.f32 %v371, 0.0
    %v490 = vmax.f32 %v374, 0.0
    %v491 = vmax.f32 %v376, 0.0
    %v492 = vmax.f32 %v379, 0.0
    %v493 = vmax.f32 %v381, 0.0
    %v494 = vmax.f32 %v384, 0.0
    %v495 = vmax.f32 %v386, 0.0
    %v496 = vmax.f32 %v389, 0.0
    %v497 = vmax.f32 %v391, 0.0
    %v498 = vmax.f32 %v394, 0.0
    %v499 = vmax.f32 %v396, 0.0
    %v500 = vmax.f32 %v399, 0.0
    %v501 = vmax.f32 %v401, 0.0
    %v502 = vmax.f32 %v404, 0.0
    %v503 = vmax.f32 %v406, 0.0
    %v504 = vmax.f32 %v409, 0.0
    %v505 = vmax.f32 %v411, 0.0
    %v506 = vmax.f32 %v414, 0.0
    %v507 = vmax.f32 %v416, 0.0
    %v508 = vmax.f32 %v419, 0.0
    %v509 = vmax.f32 %v421, 0.0
    %v510 = vmax.f32 %v424, 0.0
    %v511 = vmax.f32 %v426, 0.0
    %v512 = vmax.f32 %v429, 0.0
    %v513 = vmax.f32 %v431, 0.0
    %v514 = vmax.f32 %v434, 0.0
    %v515 = vmax.f32 %v436, 0.0
    %v516 = vmax.f32 %v439, 0.0
    %v517 = vmax.f32 %v441, 0.0
    %v518 = vmax.f32 %v444, 0.0
    %v519 = vmax.f32 %v446, 0.0
    %v520 = vmax.f32 %v449, 0.0
    %v521 = vmax.f32 %v451, 0.0
    %v522 = vmax.f32 %v454, 0.0
    %v523 = vmax.f32 %v456, 0.0
    %v524 = vmax.f32 %v459, 0.0
    %v525 = vmax.f32 %v461, 0.0
    %v526 = vmax.f32 %v464, 0.0
    %v527 = vmax.f32 %v466, 0.0
    %v528 = vmax.f32 %v469, 0.0
    %v529 = vld [vmem:[%s3] sm:$0x1]
    %v531 = vperm.slane %v529, 0
    %v533 = vmul.f32 %v472, %v531
    %v534 = vmul.f32 %v473, %v531
    %v535 = vmul.f32 %v474, %v531
    %v536 = vmul.f32 %v475, %v531
    %v537 = vmul.f32 %v476, %v531
    %v538 = vmul.f32 %v477, %v531
    %v539 = vmul.f32 %v478, %v531
    %v540 = vmul.f32 %v479, %v531
    %v541 = vmul.f32 %v480, %v531
    %v542 = vmul.f32 %v481, %v531
    %v543 = vmul.f32 %v482, %v531
    %v544 = vmul.f32 %v483, %v531
    %v545 = vmul.f32 %v484, %v531
    %v546 = vmul.f32 %v485, %v531
    %v547 = vmul.f32 %v486, %v531
    %v548 = vmul.f32 %v487, %v531
    %v549 = vmul.f32 %v488, %v531
    %v550 = vmul.f32 %v489, %v531
    %v551 = vmul.f32 %v490, %v531
    %v552 = vmul.f32 %v491, %v531
    %v553 = vmul.f32 %v492, %v531
    %v554 = vmul.f32 %v493, %v531
    %v555 = vmul.f32 %v494, %v531
    %v556 = vmul.f32 %v495, %v531
    %v557 = vmul.f32 %v496, %v531
    %v558 = vmul.f32 %v497, %v531
    %v559 = vmul.f32 %v498, %v531
    %v560 = vmul.f32 %v499, %v531
    %v561 = vmul.f32 %v500, %v531
    %v562 = vmul.f32 %v501, %v531
    %v563 = vmul.f32 %v502, %v531
    %v564 = vmul.f32 %v503, %v531
    %v565 = vmul.f32 %v504, %v531
    %v566 = vmul.f32 %v505, %v531
    %v567 = vmul.f32 %v506, %v531
    %v568 = vmul.f32 %v507, %v531
    %v569 = vmul.f32 %v508, %v531
    %v570 = vmul.f32 %v509, %v531
    %v571 = vmul.f32 %v510, %v531
    %v572 = vmul.f32 %v511, %v531
    %v573 = vmul.f32 %v512, %v531
    %v574 = vmul.f32 %v513, %v531
    %v575 = vmul.f32 %v514, %v531
    %v576 = vmul.f32 %v515, %v531
    %v577 = vmul.f32 %v516, %v531
    %v578 = vmul.f32 %v517, %v531
    %v579 = vmul.f32 %v518, %v531
    %v580 = vmul.f32 %v519, %v531
    %v581 = vmul.f32 %v520, %v531
    %v582 = vmul.f32 %v521, %v531
    %v583 = vmul.f32 %v522, %v531
    %v584 = vmul.f32 %v523, %v531
    %v585 = vmul.f32 %v524, %v531
    %v586 = vmul.f32 %v525, %v531
    %v587 = vmul.f32 %v526, %v531
    %v588 = vmul.f32 %v527, %v531
    %v589 = vmul.f32 %v528, %v531
    %590 = vst [vmem:[#allocation2] sm:$0xff] %v533
    %591 = vst [vmem:[#allocation2 + $0x8] sm:$0xff] %v534
    %592 = vst [vmem:[#allocation2 + $0x10] sm:$0xff] %v535
    %593 = vst [vmem:[#allocation2 + $0x18] sm:$0xff] %v536
    %594 = vst [vmem:[#allocation2 + $0x20] sm:$0xff] %v537
    %595 = vst [vmem:[#allocation2 + $0x28] sm:$0xff] %v538
    %596 = vst [vmem:[#allocation2 + $0x30] sm:$0xff] %v539
    %597 = vst [vmem:[#allocation2 + $0x38] sm:$0xff] %v540
    %598 = vst [vmem:[#allocation2 + $0x40] sm:$0xff] %v541
    %599 = vst [vmem:[#allocation2 + $0x48] sm:$0xff] %v542
    %600 = vst [vmem:[#allocation2 + $0x50] sm:$0xff] %v543
    %601 = vst [vmem:[#allocation2 + $0x58] sm:$0xff] %v544
    %602 = vst [vmem:[#allocation2 + $0x60] sm:$0xff] %v545
    %603 = vst [vmem:[#allocation2 + $0x68] sm:$0xff] %v546
    %604 = vst [vmem:[#allocation2 + $0x70] sm:$0xff] %v547
    %605 = vst [vmem:[#allocation2 + $0x78] sm:$0xff] %v548
    %606 = vst [vmem:[#allocation2 + $0x80] sm:$0xff] %v549
    %607 = vst [vmem:[#allocation2 + $0x88] sm:$0xff] %v550
    %608 = vst [vmem:[#allocation2 + $0x90] sm:$0xff] %v551
    %609 = vst [vmem:[#allocation2 + $0x98] sm:$0xff] %v552
    %610 = vst [vmem:[#allocation2 + $0xa0] sm:$0xff] %v553
    %611 = vst [vmem:[#allocation2 + $0xa8] sm:$0xff] %v554
    %612 = vst [vmem:[#allocation2 + $0xb0] sm:$0xff] %v555
    %613 = vst [vmem:[#allocation2 + $0xb8] sm:$0xff] %v556
    %614 = vst [vmem:[#allocation2 + $0xc0] sm:$0xff] %v557
    %615 = vst [vmem:[#allocation2 + $0xc8] sm:$0xff] %v558
    %616 = vst [vmem:[#allocation2 + $0xd0] sm:$0xff] %v559
    %617 = vst [vmem:[#allocation2 + $0xd8] sm:$0xff] %v560
    %618 = vst [vmem:[#allocation2 + $0xe0] sm:$0xff] %v561
    %619 = vst [vmem:[#allocation2 + $0xe8] sm:$0xff] %v562
    %620 = vst [vmem:[#allocation2 + $0xf0] sm:$0xff] %v563
    %621 = vst [vmem:[#allocation2 + $0xf8] sm:$0xff] %v564
    %622 = vst [vmem:[#allocation2 + $0x100] sm:$0xff] %v565
    %623 = vst [vmem:[#allocation2 + $0x108] sm:$0xff] %v566
    %624 = vst [vmem:[#allocation2 + $0x110] sm:$0xff] %v567
    %625 = vst [vmem:[#allocation2 + $0x118] sm:$0xff] %v568
    %626 = vst [vmem:[#allocation2 + $0x120] sm:$0xff] %v569
    %627 = vst [vmem:[#allocation2 + $0x128] sm:$0xff] %v570
    %628 = vst [vmem:[#allocation2 + $0x130] sm:$0xff] %v571
    %629 = vst [vmem:[#allocation2 + $0x138] sm:$0xff] %v572
    %630 = vst [vmem:[#allocation2 + $0x140] sm:$0xff] %v573
    %631 = vst [vmem:[#allocation2 + $0x148] sm:$0xff] %v574
    %632 = vst [vmem:[#allocation2 + $0x150] sm:$0xff] %v575
    %633 = vst [vmem:[#allocation2 + $0x158] sm:$0xff] %v576
    %634 = vst [vmem:[#allocation2 + $0x160] sm:$0xff] %v577
    %635 = vst [vmem:[#allocation2 + $0x168] sm:$0xff] %v578
    %636 = vst [vmem:[#allocation2 + $0x170] sm:$0xff] %v579
    %637 = vst [vmem:[#allocation2 + $0x178] sm:$0xff] %v580
    %638 = vst [vmem:[#allocation2 + $0x180] sm:$0xff] %v581
    %639 = vst [vmem:[#allocation2 + $0x188] sm:$0xff] %v582
    %640 = vst [vmem:[#allocation2 + $0x190] sm:$0xff] %v583
    %641 = vst [vmem:[#allocation2 + $0x198] sm:$0xff] %v584
    %642 = vst [vmem:[#allocation2 + $0x1a0] sm:$0xff] %v585
    %643 = vst [vmem:[#allocation2 + $0x1a8] sm:$0xff] %v586
    %644 = vst [vmem:[#allocation2 + $0x1b0] sm:$0xff] %v587
    %645 = vst [vmem:[#allocation2 + $0x1b8] sm:$0xff] %v588
    %646 = vst [vmem:[#allocation2 + $0x1c0] sm:$0xff] %v589
    // Predicated region
    $region18: #{tpu_custom_call.1} parent=1 // pred_check
      _
    $region19: #{tpu_custom_call.1} parent=1 // pred_check_branch
      %648 = sbr.rel (0) target = $region21
    $region20: #{tpu_custom_call.1} parent=1 // pred_region
      %650 = vsyncadd [#allocation3], 0
      %s651 = sshll.u32 [#allocation2], 4
      %s652 = int_to_ptr.vmem [resolvable:$true] %s651
      %s653 = sshll.u32 %s4, 4
      %s654 = int_to_ptr.hbm [resolvable:$true] %s653
      %659 = dma.vmem_to_hbm [thread:$0]  %s652, 7296, %s654, [#allocation3], 128, 128, 8
    $region21: #{tpu_custom_call.1} parent=1 // pred_fallthru
      _
    // Predicated region
    $region22: #{tpu_custom_call.1} parent=1 // pred_check
      _
    $region23: #{tpu_custom_call.1} parent=1 // pred_check_branch
      %661 = sbr.rel (0) target = $region25
    $region24: #{tpu_custom_call.1} parent=1 // pred_region
      %663 = dma.done [#allocation3], 7296
    $region25: #{tpu_custom_call.1} parent=1 // pred_fallthru
      _
    %664 = vsyncpa [#allocation3], 1

</llo_original>
